<compile_context>
chip_gen: v5e
topology: v5e:2x2
jax: 0.10.0
libtpu: 0.0.40
codegen_flags: <defaults>
</compile_context>

<pallas_src>
import jax
import jax.numpy as jnp
from jax.experimental import pallas as pl
from jax.experimental.pallas import tpu as pltpu
import numpy as np


def _vid_kernel(x_ref, t_ref, w1_ref, w2_ref, w3_ref, hiv_ref, out_ref):
    # x_ref: (Cin, TL)   t_ref: (Ct, TL)   w*_ref: transposed conv weights
    # hiv_ref: (Ct, 1) = 0.5 / pred_var    out_ref: (1, 1, Ct, 128) partials
    x = x_ref[...].astype(jnp.float32)
    h1 = jnp.maximum(
        jnp.dot(w1_ref[...], x, preferred_element_type=jnp.float32), 0.0)
    h2 = jnp.maximum(
        jnp.dot(w2_ref[...], h1, preferred_element_type=jnp.float32), 0.0)
    pred_mean = jnp.dot(w3_ref[...], h2, preferred_element_type=jnp.float32)

    diff = pred_mean - t_ref[...].astype(jnp.float32)
    contrib = diff * diff * hiv_ref[...]          # 0.5*(pm-t)^2/pred_var, (Ct, TL)

    # Fold lanes TL -> 128 with vreg-aligned static slices (pure VPU adds,
    # no cross-lane XLU reduce, no RMW of a shared accumulator).
    tl = contrib.shape[-1]
    acc = contrib[:, 0:128]
    for k in range(1, tl // 128):
        acc = acc + contrib[:, k * 128:(k + 1) * 128]
    out_ref[...] = acc[None, None]                # (1, 1, Ct, 128)


def _adaptive_avg_pool2d(x, out_hw):
    """NCHW adaptive average pool (plain-JAX glue, used only if s_H != t_H)."""
    n, c, h, w = x.shape
    if h == out_hw and w == out_hw:
        return x
    if h % out_hw == 0 and w % out_hw == 0:
        kh, kw = h // out_hw, w // out_hw
        return x.reshape(n, c, out_hw, kh, out_hw, kw).mean(axis=(3, 5))
    # TODO(synk): general (non-divisible) adaptive_avg_pool2d not implemented.
    raise NotImplementedError("adaptive_avg_pool2d requires divisible sizes")


def _pick_lane_tile(hw_pad, cap=2048):
    """Largest multiple of 128 that divides hw_pad, capped (hw_pad % 128 == 0)."""
    for mult in range(min(hw_pad // 128, cap // 128), 0, -1):
        cand = 128 * mult
        if hw_pad % cand == 0:
            return cand
    return 128


def vid_loss(x, target, w1, w2, w3, log_scale, *, eps=1e-5, lane_tile_cap=2048):
    """x: (N, Cin, H, W), target: (N, Ct, Ht, Wt)  ->  scalar loss (f32)."""
    s_h, t_h = x.shape[2], target.shape[2]
    if s_h > t_h:
        x = _adaptive_avg_pool2d(x, t_h)
    elif s_h < t_h:
        target = _adaptive_avg_pool2d(target, s_h)

    n, c_in, h, w = x.shape
    c_tgt = target.shape[1]
    c_mid = w1.shape[1]
    hw = h * w

    # Keep NCHW: (N, C, H, W) -> (N, C, H*W)  (free reshape, no transpose pass).
    x3 = x.reshape(n, c_in, hw)
    t3 = target.reshape(n, c_tgt, hw)

    # Pad spatial dim to a multiple of 128.  Zero columns contribute exactly 0
    # (bias-free 1x1 convs + ReLU(0)=0 + zero target), so only the divisor
    # (true element count) needs to stay unpadded.
    hw_pad = ((hw + 127) // 128) * 128
    if hw_pad != hw:
        x3 = jnp.pad(x3, ((0, 0), (0, 0), (0, hw_pad - hw)))
        t3 = jnp.pad(t3, ((0, 0), (0, 0), (0, hw_pad - hw)))

    tl = _pick_lane_tile(hw_pad, lane_tile_cap)
    n_t = hw_pad // tl

    # Transposed 1x1-conv weights so the kernel computes W @ X.
    w1t = w1.T.astype(jnp.float32)      # (c_mid, c_in)
    w2t = w2.T.astype(jnp.float32)      # (c_mid, c_mid)
    w3t = w3.T.astype(jnp.float32)      # (c_tgt, c_mid)

    # Variance math hoisted out of the kernel.
    pred_var = jax.nn.softplus(log_scale.astype(jnp.float32)) + eps   # (c_tgt,)
    half_inv_var = (0.5 / pred_var).reshape(c_tgt, 1)

    partials = pl.pallas_call(
        _vid_kernel,
        out_shape=jax.ShapeDtypeStruct((n, n_t, c_tgt, 128), jnp.float32),
        grid_spec=pltpu.PrefetchScalarGridSpec(
            num_scalar_prefetch=0,
            grid=(n, n_t),
            in_specs=[
                pl.BlockSpec((None, c_in, tl), lambda b, t: (b, 0, t)),
                pl.BlockSpec((None, c_tgt, tl), lambda b, t: (b, 0, t)),
                pl.BlockSpec((c_mid, c_in), lambda b, t: (0, 0)),
                pl.BlockSpec((c_mid, c_mid), lambda b, t: (0, 0)),
                pl.BlockSpec((c_tgt, c_mid), lambda b, t: (0, 0)),
                pl.BlockSpec((c_tgt, 1), lambda b, t: (0, 0)),
            ],
            out_specs=pl.BlockSpec((1, 1, c_tgt, 128),
                                   lambda b, t: (b, t, 0, 0)),
        ),
        compiler_params=pltpu.CompilerParams(
            dimension_semantics=("parallel", "parallel")),
    )(x3, t3, w1t, w2t, w3t, half_inv_var)

    m = n * hw                                        # true (unpadded) rows
    sq_term = jnp.sum(partials) / jnp.float32(m * c_tgt)
    logvar_term = 0.5 * jnp.mean(jnp.log(pred_var))   # analytic log-var part
    return sq_term + logvar_term


def _reference(x, target, w1, w2, w3, log_scale, eps=1e-5):
    n, c_in, h, w = x.shape
    x2d = jnp.transpose(x, (0, 2, 3, 1)).reshape(-1, c_in)
    t2d = jnp.transpose(target, (0, 2, 3, 1)).reshape(x2d.shape[0], -1)
    h1 = jnp.maximum(x2d @ w1, 0.0)
    h2 = jnp.maximum(h1 @ w2, 0.0)
    pm = h2 @ w3
    pv = jnp.log1p(jnp.exp(log_scale)) + eps
    nlp = 0.5 * ((pm - t2d) ** 2 / pv + jnp.log(pv))
    return jnp.mean(nlp)


if __name__ == "__main__":
    # Module config: num_input_channels=4, num_mid_channel=8, num_target_channels=4
    c_in, c_mid, c_tgt = 4, 8, 4
    n, hh, ww = 2, 16, 16
    init_pred_var, eps = 5.0, 1e-5

    key = jax.random.PRNGKey(0)
    k1, k2, k3, k4, k5 = jax.random.split(key, 5)

    # Deterministic parameter init (conv1x1 weights stored as (Cin, Cout) matrices).
    w1 = jax.random.normal(k1, (c_in, c_mid), jnp.float32) * 0.1
    w2 = jax.random.normal(k2, (c_mid, c_mid), jnp.float32) * 0.1
    w3 = jax.random.normal(k3, (c_mid, c_tgt), jnp.float32) * 0.1
    log_scale = jnp.full((c_tgt,),
                         np.log(np.exp(init_pred_var - eps) - 1.0),
                         dtype=jnp.float32)

    x = jax.random.normal(k4, (n, c_in, hh, ww), jnp.float32)        # student feat (NCHW)
    target = jax.random.normal(k5, (n, c_tgt, hh, ww), jnp.float32)  # teacher feat (NCHW)

    loss = vid_loss(x, target, w1, w2, w3, log_scale, eps=eps)
    jax.block_until_ready(loss)

    ref = _reference(x, target, w1, w2, w3, log_scale, eps=eps)
    assert np.allclose(np.asarray(loss), np.asarray(ref), rtol=1e-5, atol=1e-5), (
        loss, ref)
    print("KERNEL_OK")
</pallas_src>

<mosaic_0001>
module attributes {stable_mosaic.version = 11 : i64} {
  func.func @_vid_kernel(%arg0: i32, %arg1: i32, %arg2: memref<1x4x256xf32, #tpu.memory_space<vmem>>, %arg3: memref<1x4x256xf32, #tpu.memory_space<vmem>>, %arg4: memref<8x4xf32, #tpu.memory_space<vmem>>, %arg5: memref<8x8xf32, #tpu.memory_space<vmem>>, %arg6: memref<4x8xf32, #tpu.memory_space<vmem>>, %arg7: memref<4x1xf32, #tpu.memory_space<vmem>>, %arg8: memref<1x1x4x128xf32, #tpu.memory_space<vmem>>) attributes {dimension_semantics = [#tpu.dimension_semantics<parallel>, #tpu.dimension_semantics<parallel>], iteration_bounds = array<i64: 2, 1>, scalar_prefetch = 0 : i64, scratch_operands = 0 : i64, tpu.core_type = #tpu.core_type<tc>, window_params = [{transform_indices = @transform_0, window_bounds = array<i64: 1, 4, 256>}, {transform_indices = @transform_1, window_bounds = array<i64: 1, 4, 256>}, {pipeline_mode = #tpu.pipeline_mode<synchronous>, transform_indices = @transform_2, window_bounds = array<i64: 8, 4>}, {pipeline_mode = #tpu.pipeline_mode<synchronous>, transform_indices = @transform_3, window_bounds = array<i64: 8, 8>}, {pipeline_mode = #tpu.pipeline_mode<synchronous>, transform_indices = @transform_4, window_bounds = array<i64: 4, 8>}, {pipeline_mode = #tpu.pipeline_mode<synchronous>, transform_indices = @transform_5, window_bounds = array<i64: 4, 1>}, {transform_indices = @transform_6, window_bounds = array<i64: 1, 1, 4, 128>}]} {
    %c0 = arith.constant 0 : index
    %c0_0 = arith.constant 0 : index
    %c0_1 = arith.constant 0 : index
    %0 = vector.load %arg2[%c0, %c0_0, %c0_1] : memref<1x4x256xf32, #tpu.memory_space<vmem>>, vector<1x4x256xf32>
    %1 = vector.shape_cast %0 : vector<1x4x256xf32> to vector<4x256xf32>
    %c0_2 = arith.constant 0 : index
    %c0_3 = arith.constant 0 : index
    %2 = vector.load %arg4[%c0_2, %c0_3] : memref<8x4xf32, #tpu.memory_space<vmem>>, vector<8x4xf32>
    %cst = arith.constant dense<0.000000e+00> : vector<8x256xf32>
    %3 = tpu.matmul %2, %1, %cst {dimension_numbers = #tpu.dot_dimension_numbers<[1], [0], [0], [1], [0, 0, 1, 1], [], []>} : vector<8x4xf32>, vector<4x256xf32>, vector<8x256xf32> -> vector<8x256xf32>
    %cst_4 = arith.constant 0.000000e+00 : f32
    %4 = vector.broadcast %cst_4 : f32 to vector<8x256xf32>
    %5 = arith.maximumf %3, %4 : vector<8x256xf32>
    %c0_5 = arith.constant 0 : index
    %c0_6 = arith.constant 0 : index
    %6 = vector.load %arg5[%c0_5, %c0_6] : memref<8x8xf32, #tpu.memory_space<vmem>>, vector<8x8xf32>
    %cst_7 = arith.constant dense<0.000000e+00> : vector<8x256xf32>
    %7 = tpu.matmul %6, %5, %cst_7 {dimension_numbers = #tpu.dot_dimension_numbers<[1], [0], [0], [1], [0, 0, 1, 1], [], []>} : vector<8x8xf32>, vector<8x256xf32>, vector<8x256xf32> -> vector<8x256xf32>
    %cst_8 = arith.constant 0.000000e+00 : f32
    %8 = vector.broadcast %cst_8 : f32 to vector<8x256xf32>
    %9 = arith.maximumf %7, %8 : vector<8x256xf32>
    %c0_9 = arith.constant 0 : index
    %c0_10 = arith.constant 0 : index
    %10 = vector.load %arg6[%c0_9, %c0_10] : memref<4x8xf32, #tpu.memory_space<vmem>>, vector<4x8xf32>
    %cst_11 = arith.constant dense<0.000000e+00> : vector<4x256xf32>
    %11 = tpu.matmul %10, %9, %cst_11 {dimension_numbers = #tpu.dot_dimension_numbers<[1], [0], [0], [1], [0, 0, 1, 1], [], []>} : vector<4x8xf32>, vector<8x256xf32>, vector<4x256xf32> -> vector<4x256xf32>
    %c0_12 = arith.constant 0 : index
    %c0_13 = arith.constant 0 : index
    %c0_14 = arith.constant 0 : index
    %12 = vector.load %arg3[%c0_12, %c0_13, %c0_14] : memref<1x4x256xf32, #tpu.memory_space<vmem>>, vector<1x4x256xf32>
    %13 = vector.shape_cast %12 : vector<1x4x256xf32> to vector<4x256xf32>
    %14 = arith.subf %11, %13 : vector<4x256xf32>
    %15 = arith.mulf %14, %14 : vector<4x256xf32>
    %c0_15 = arith.constant 0 : index
    %c0_16 = arith.constant 0 : index
    %16 = vector.load %arg7[%c0_15, %c0_16] : memref<4x1xf32, #tpu.memory_space<vmem>>, vector<4x1xf32>
    %17 = vector.broadcast %16 : vector<4x1xf32> to vector<4x256xf32>
    %18 = arith.mulf %15, %17 : vector<4x256xf32>
    %19 = vector.extract_strided_slice %18 {offsets = [0, 0], sizes = [4, 128], strides = [1, 1]} : vector<4x256xf32> to vector<4x128xf32>
    %20 = vector.extract_strided_slice %18 {offsets = [0, 128], sizes = [4, 128], strides = [1, 1]} : vector<4x256xf32> to vector<4x128xf32>
    %21 = arith.addf %19, %20 : vector<4x128xf32>
    %22 = vector.shape_cast %21 : vector<4x128xf32> to vector<1x1x4x128xf32>
    %c0_17 = arith.constant 0 : index
    %c0_18 = arith.constant 0 : index
    %c0_19 = arith.constant 0 : index
    %c0_20 = arith.constant 0 : index
    %23 = vector.load %arg8[%c0_17, %c0_18, %c0_19, %c0_20] : memref<1x1x4x128xf32, #tpu.memory_space<vmem>>, vector<1x1x4x128xf32>
    tpu.vector_store %arg8[%c0_17, %c0_18, %c0_19, %c0_20], %22 {strides = array<i32>} : memref<1x1x4x128xf32, #tpu.memory_space<vmem>>, vector<1x1x4x128xf32>,
    return
  }
  func.func @transform_0(%arg0: i32, %arg1: i32) -> (i32, i32, i32) {
    %c0_i32 = arith.constant 0 : i32
    %c0_i32_0 = arith.constant 0 : i32
    return %arg0, %c0_i32, %arg1 : i32, i32, i32
  }
  func.func @transform_1(%arg0: i32, %arg1: i32) -> (i32, i32, i32) {
    %c0_i32 = arith.constant 0 : i32
    %c0_i32_0 = arith.constant 0 : i32
    return %arg0, %c0_i32, %arg1 : i32, i32, i32
  }
  func.func @transform_2(%arg0: i32, %arg1: i32) -> (i32, i32) {
    %c0_i32 = arith.constant 0 : i32
    %c0_i32_0 = arith.constant 0 : i32
    %c0_i32_1 = arith.constant 0 : i32
    return %c0_i32, %c0_i32_0 : i32, i32
  }
  func.func @transform_3(%arg0: i32, %arg1: i32) -> (i32, i32) {
    %c0_i32 = arith.constant 0 : i32
    %c0_i32_0 = arith.constant 0 : i32
    %c0_i32_1 = arith.constant 0 : i32
    return %c0_i32, %c0_i32_0 : i32, i32
  }
  func.func @transform_4(%arg0: i32, %arg1: i32) -> (i32, i32) {
    %c0_i32 = arith.constant 0 : i32
    %c0_i32_0 = arith.constant 0 : i32
    %c0_i32_1 = arith.constant 0 : i32
    return %c0_i32, %c0_i32_0 : i32, i32
  }
  func.func @transform_5(%arg0: i32, %arg1: i32) -> (i32, i32) {
    %c0_i32 = arith.constant 0 : i32
    %c0_i32_0 = arith.constant 0 : i32
    %c0_i32_1 = arith.constant 0 : i32
    return %c0_i32, %c0_i32_0 : i32, i32
  }
  func.func @transform_6(%arg0: i32, %arg1: i32) -> (i32, i32, i32, i32) {
    %c0_i32 = arith.constant 0 : i32
    %c0_i32_0 = arith.constant 0 : i32
    %c0_i32_1 = arith.constant 0 : i32
    return %arg0, %arg1, %c0_i32, %c0_i32_0 : i32, i32, i32, i32
  }
}

</mosaic_0001>

<llo_original>
// kernel: tpu_custom_call.1
$region0: #{tpu_custom_call.1}
  #allocation0 [shape = 'u32[]', space=smem, size = 0x4, offset = 0x4, fixed_abs, tag = 'smem constant byte address 0x4 - core index']
  #allocation1 [shape = 'u32[72,128]{1,0:T(1,128)}', space=vmem, size = 0x9000, scoped, tag = 'internal scratch']
  %s0 = inlined_call_operand.hbm [shape: f32[2,4,256], index: 0, kind: input, shape index: {}]
  %s1 = inlined_call_operand.hbm [shape: f32[2,4,256], index: 1, kind: input, shape index: {}]
  %s2 = inlined_call_operand.vmem [shape: f32[8,4], index: 2, kind: input, shape index: {}]
  %s3 = inlined_call_operand.vmem [shape: f32[8,8], index: 3, kind: input, shape index: {}]
  %s4 = inlined_call_operand.vmem [shape: f32[4,8], index: 4, kind: input, shape index: {}]
  %s5 = inlined_call_operand.vmem [shape: f32[4,1], index: 5, kind: input, shape index: {}]
  %s6 = inlined_call_operand.hbm [shape: f32[2,1,4,128], index: 6, kind: output, shape index: {}]
  %s7 = sld [smem:[#allocation0]]
  $region65: #{tpu_custom_call.1} parent=0
    _
  %s9 = ssub.s32 1, %s7
  %s10 = scalar_select 0, %s9, %s7
  $region1: #{tpu_custom_call.1} parent=0
    #allocation2 [shape = 'u8[8192]{0}', space=vmem, size = 0x2000, scoped, tag = 'input window, operand 0']
    #allocation3 [shape = 's32[2]{0}', space=sflag, size = 0x8, scoped, tag = 'scoped memory for tpu_custom_call.1']
    #allocation4 [shape = 's32[2]{0}', space=sflag, size = 0x8, scoped, tag = 'scoped memory for tpu_custom_call.1']
    #allocation5 [shape = 'u8[8192]{0}', space=vmem, size = 0x2000, scoped, tag = 'input window, operand 1']
    #allocation6 [shape = 's32[2]{0}', space=sflag, size = 0x8, scoped, tag = 'scoped memory for tpu_custom_call.1']
    #allocation7 [shape = 'u8[4096]{0}', space=vmem, size = 0x1000, scoped, tag = 'output window, operand 0']
    %11 = vsyncpa [#allocation3], 0
    %s12 = scalar_lea.sflag [#allocation3], 1
    %13 = vsyncpa %s12, 0
    %14 = vsyncpa [#allocation6], 0
    %s15 = scalar_lea.sflag [#allocation6], 1
    %16 = vsyncpa %s15, 0
    %17 = vsyncpa [#allocation4], 0
    %s18 = scalar_lea.sflag [#allocation4], 1
    %19 = vsyncpa %s18, 0
    loop: start=0, step=1, limit=4
    $region2: #{tpu_custom_call.1} parent=1 // loop_pre_header
      _
    $region3: #{tpu_custom_call.1} parent=1 // loop_header
      %s21 = sphi 0, %s25
      %p22 = scmp.ge.s32.totalorder %s21, 4
      %s28 = sphi 0, %s40
      %s29 = sphi 0, %s36
      %s30 = sphi 0, %s28
      %s31 = sphi 0, %s29
      %s32 = sphi 0, %s30
      %s33 = sphi 0, %s31
      %s45 = sphi 0, %s47
      %s48 = sphi 0, %s45
      %s49 = sphi 0, %s48
      %s65 = sphi 0, %s49
      %s73 = sphi 0, %s75
      %s76 = sphi 0, %s73
      %s77 = sphi 0, %s76
      %s93 = sphi 0, %s77
      %s97 = sphi 0, %s97
      %s99 = sphi 0, %s97
      %s100 = sphi 0, %s99
      %s114 = sphi 0, %s100
      %s118 = sphi 0, %s118
      %s120 = sphi 0, %s118
      %s121 = sphi 0, %s120
      %s135 = sphi 0, %s121
      %s139 = sphi 0, %s139
      %s141 = sphi 0, %s139
      %s142 = sphi 0, %s141
      %s156 = sphi 0, %s142
      %s160 = sphi 0, %s160
      %s162 = sphi 0, %s160
      %s163 = sphi 0, %s162
      %s177 = sphi 0, %s163
      %s185 = sphi 0, %s187
      %s188 = sphi 0, %s185
      %s189 = sphi 0, %s188
      %s205 = sphi 0, %s189
    $region4: #{tpu_custom_call.1} parent=1 // loop_header_branch
      %24 = sbr.rel (%p22) target = $region8
    $region5: #{tpu_custom_call.1} parent=1 // loop_body
      %s26 = ssub.s32 %s21, 1
      %s27 = ssub.s32 %s21, 2
      %s34 = sadd.s32 1, %s29
      %p35 = scmp.ge.s32.totalorder %s34, 1
      %s36 = scalar_select %p35, 0, %s34
      %s37 = sadd.s32 1, %s28
      %s38 = scalar_select %p35, %s37, %s28
      %p39 = scmp.ge.s32.totalorder %s38, 2
      %s40 = scalar_select %p39, 0, %s38
      %s41 = ssub.s32 %s28, %s40
      %s42 = ssub.s32 %s29, %s36
      %s43 = sor.u32 %s41, %s42
      %p44 = scmp.eq.s32.totalorder %s43, 0
      %s46 = sadd.s32 %s45, 1
      %s47 = scalar_select %p44, %s45, %s46
      %p50 = pneg %p44
      %p51 = scmp.eq.s32.totalorder %s21, 1
      %p52 = por %p50, %p51
      %p53 = scmp.ne.s32.totalorder %s45, %s48
      %p54 = scmp.eq.s32.totalorder %s21, 0
      %p55 = por %p53, %p54
      %p56 = scmp.ne.s32.totalorder %s45, %s48
      %p57 = scmp.eq.s32.totalorder %s26, 1
      %p58 = por %p56, %p57
      %p59 = scmp.ne.s32.totalorder %s48, %s49
      %p60 = scmp.eq.s32.totalorder %s26, 0
      %p61 = por %p59, %p60
      %p62 = scmp.ne.s32.totalorder %s48, %s49
      %p63 = scmp.eq.s32.totalorder %s27, 1
      %p64 = por %p62, %p63
      %p66 = scmp.ne.s32.totalorder %s49, %s65
      %p67 = scmp.eq.s32.totalorder %s27, 0
      %p68 = por %p66, %p67
      %s69 = ssub.s32 %s28, %s40
      %s70 = ssub.s32 %s29, %s36
      %s71 = sor.u32 %s69, %s70
      %p72 = scmp.eq.s32.totalorder %s71, 0
      %s74 = sadd.s32 %s73, 1
      %s75 = scalar_select %p72, %s73, %s74
      %p78 = pneg %p72
      %p79 = scmp.eq.s32.totalorder %s21, 1
      %p80 = por %p78, %p79
      %p81 = scmp.ne.s32.totalorder %s73, %s76
      %p82 = scmp.eq.s32.totalorder %s21, 0
      %p83 = por %p81, %p82
      %p84 = scmp.ne.s32.totalorder %s73, %s76
      %p85 = scmp.eq.s32.totalorder %s26, 1
      %p86 = por %p84, %p85
      %p87 = scmp.ne.s32.totalorder %s76, %s77
      %p88 = scmp.eq.s32.totalorder %s26, 0
      %p89 = por %p87, %p88
      %p90 = scmp.ne.s32.totalorder %s76, %s77
      %p91 = scmp.eq.s32.totalorder %s27, 1
      %p92 = por %p90, %p91
      %p94 = scmp.ne.s32.totalorder %s77, %s93
      %p95 = scmp.eq.s32.totalorder %s27, 0
      %p96 = por %p94, %p95
      %s98 = sadd.s32 %s97, 1
      %p101 = scmp.eq.s32.totalorder %s21, 1
      %p102 = scmp.ne.s32.totalorder %s97, %s99
      %p103 = scmp.eq.s32.totalorder %s21, 0
      %p104 = por %p102, %p103
      %p105 = scmp.ne.s32.totalorder %s97, %s99
      %p106 = scmp.eq.s32.totalorder %s26, 1
      %p107 = por %p105, %p106
      %p108 = scmp.ne.s32.totalorder %s99, %s100
      %p109 = scmp.eq.s32.totalorder %s26, 0
      %p110 = por %p108, %p109
      %p111 = scmp.ne.s32.totalorder %s99, %s100
      %p112 = scmp.eq.s32.totalorder %s27, 1
      %p113 = por %p111, %p112
      %p115 = scmp.ne.s32.totalorder %s100, %s114
      %p116 = scmp.eq.s32.totalorder %s27, 0
      %p117 = por %p115, %p116
      %s119 = sadd.s32 %s118, 1
      %p122 = scmp.eq.s32.totalorder %s21, 1
      %p123 = scmp.ne.s32.totalorder %s118, %s120
      %p124 = scmp.eq.s32.totalorder %s21, 0
      %p125 = por %p123, %p124
      %p126 = scmp.ne.s32.totalorder %s118, %s120
      %p127 = scmp.eq.s32.totalorder %s26, 1
      %p128 = por %p126, %p127
      %p129 = scmp.ne.s32.totalorder %s120, %s121
      %p130 = scmp.eq.s32.totalorder %s26, 0
      %p131 = por %p129, %p130
      %p132 = scmp.ne.s32.totalorder %s120, %s121
      %p133 = scmp.eq.s32.totalorder %s27, 1
      %p134 = por %p132, %p133
      %p136 = scmp.ne.s32.totalorder %s121, %s135
      %p137 = scmp.eq.s32.totalorder %s27, 0
      %p138 = por %p136, %p137
      %s140 = sadd.s32 %s139, 1
      %p143 = scmp.eq.s32.totalorder %s21, 1
      %p144 = scmp.ne.s32.totalorder %s139, %s141
      %p145 = scmp.eq.s32.totalorder %s21, 0
      %p146 = por %p144, %p145
      %p147 = scmp.ne.s32.totalorder %s139, %s141
      %p148 = scmp.eq.s32.totalorder %s26, 1
      %p149 = por %p147, %p148
      %p150 = scmp.ne.s32.totalorder %s141, %s142
      %p151 = scmp.eq.s32.totalorder %s26, 0
      %p152 = por %p150, %p151
      %p153 = scmp.ne.s32.totalorder %s141, %s142
      %p154 = scmp.eq.s32.totalorder %s27, 1
      %p155 = por %p153, %p154
      %p157 = scmp.ne.s32.totalorder %s142, %s156
      %p158 = scmp.eq.s32.totalorder %s27, 0
      %p159 = por %p157, %p158
      %s161 = sadd.s32 %s160, 1
      %p164 = scmp.eq.s32.totalorder %s21, 1
      %p165 = scmp.ne.s32.totalorder %s160, %s162
      %p166 = scmp.eq.s32.totalorder %s21, 0
      %p167 = por %p165, %p166
      %p168 = scmp.ne.s32.totalorder %s160, %s162
      %p169 = scmp.eq.s32.totalorder %s26, 1
      %p170 = por %p168, %p169
      %p171 = scmp.ne.s32.totalorder %s162, %s163
      %p172 = scmp.eq.s32.totalorder %s26, 0
      %p173 = por %p171, %p172
      %p174 = scmp.ne.s32.totalorder %s162, %s163
      %p175 = scmp.eq.s32.totalorder %s27, 1
      %p176 = por %p174, %p175
      %p178 = scmp.ne.s32.totalorder %s163, %s177
      %p179 = scmp.eq.s32.totalorder %s27, 0
      %p180 = por %p178, %p179
      %s181 = ssub.s32 %s28, %s40
      %s182 = ssub.s32 %s29, %s36
      %s183 = sor.u32 %s181, %s182
      %p184 = scmp.eq.s32.totalorder %s183, 0
      %s186 = sadd.s32 %s185, 1
      %s187 = scalar_select %p184, %s185, %s186
      %p190 = pneg %p184
      %p191 = scmp.eq.s32.totalorder %s21, 1
      %p192 = por %p190, %p191
      %p193 = scmp.ne.s32.totalorder %s185, %s188
      %p194 = scmp.eq.s32.totalorder %s21, 0
      %p195 = por %p193, %p194
      %p196 = scmp.ne.s32.totalorder %s185, %s188
      %p197 = scmp.eq.s32.totalorder %s26, 1
      %p198 = por %p196, %p197
      %p199 = scmp.ne.s32.totalorder %s188, %s189
      %p200 = scmp.eq.s32.totalorder %s26, 0
      %p201 = por %p199, %p200
      %p202 = scmp.ne.s32.totalorder %s188, %s189
      %p203 = scmp.eq.s32.totalorder %s27, 1
      %p204 = por %p202, %p203
      %p206 = scmp.ne.s32.totalorder %s189, %s205
      %p207 = scmp.eq.s32.totalorder %s27, 0
      %p208 = por %p206, %p207
      %p209 = scmp.le.s32.totalorder 1, %s21
      %p210 = scmp.lt.s32.totalorder %s21, 3
      %p211 = pnand %p209, %p210
      %p212 = pneg %p211
      // Predicated region
      $region9: #{tpu_custom_call.1} parent=5 // pred_check
        _
      $region10: #{tpu_custom_call.1} parent=5 // pred_check_branch
        %214 = sbr.rel (%p211) target = $region12
      $region11: #{tpu_custom_call.1} parent=5 // pred_region
        %s215 = ssub.s32 %s21, 1
        // Predicated region
        $region13: #{tpu_custom_call.1} parent=11 // pred_check
          %p216 = pneg %p110
        $region14: #{tpu_custom_call.1} parent=11 // pred_check_branch
          %218 = sbr.rel (%p216) target = $region16
        $region15: #{tpu_custom_call.1} parent=11 // pred_region
          _
        $region16: #{tpu_custom_call.1} parent=11 // pred_fallthru
          _
        // Predicated region
        $region17: #{tpu_custom_call.1} parent=11 // pred_check
          %p219 = pneg %p131
        $region18: #{tpu_custom_call.1} parent=11 // pred_check_branch
          %221 = sbr.rel (%p219) target = $region20
        $region19: #{tpu_custom_call.1} parent=11 // pred_region
          _
        $region20: #{tpu_custom_call.1} parent=11 // pred_fallthru
          _
        // Predicated region
        $region21: #{tpu_custom_call.1} parent=11 // pred_check
          %p222 = pneg %p152
        $region22: #{tpu_custom_call.1} parent=11 // pred_check_branch
          %224 = sbr.rel (%p222) target = $region24
        $region23: #{tpu_custom_call.1} parent=11 // pred_region
          _
        $region24: #{tpu_custom_call.1} parent=11 // pred_fallthru
          _
        // Predicated region
        $region25: #{tpu_custom_call.1} parent=11 // pred_check
          %p225 = pneg %p173
        $region26: #{tpu_custom_call.1} parent=11 // pred_check_branch
          %227 = sbr.rel (%p225) target = $region28
        $region27: #{tpu_custom_call.1} parent=11 // pred_region
          _
        $region28: #{tpu_custom_call.1} parent=11 // pred_fallthru
          _
      $region12: #{tpu_custom_call.1} parent=5 // pred_fallthru
        _
      %p228 = scmp.lt.s32.totalorder %s21, 2
      // Predicated region
      $region29: #{tpu_custom_call.1} parent=5 // pred_check
        %p229 = pneg %p228
      $region30: #{tpu_custom_call.1} parent=5 // pred_check_branch
        %231 = sbr.rel (%p229) target = $region32
      $region31: #{tpu_custom_call.1} parent=5 // pred_region
        // Predicated region
        $region33: #{tpu_custom_call.1} parent=31 // pred_check
          %p232 = pneg %p55
        $region34: #{tpu_custom_call.1} parent=31 // pred_check_branch
          %234 = sbr.rel (%p232) target = $region36
        $region35: #{tpu_custom_call.1} parent=31 // pred_region
          %s235 = sand.u32 %s45, 1
          %s236 = scalar_lea.sflag [#allocation3], %s235
          %s237 = sand.u32 %s45, 1
          %s238 = smul.addr %s237, 8
          %s239 = scalar_lea.vmem [#allocation2], %s238
          %s240 = smul.u32 2, %s29
          %242 = vsyncadd %s236, 0
          %s243 = smul.addr %s28, 2
          %s244 = sadd.s32 %s240, %s243
          %s245 = smul.addr %s244, 4
          %s246 = scalar_lea.hbm %s0, %s245
          %s248 = sshll.u32 %s246, 4
          %s249 = int_to_ptr.hbm [resolvable:$true] %s248
          %s250 = sshll.u32 %s239, 4
          %s251 = int_to_ptr.vmem [resolvable:$true] %s250
          %253 = dma.hbm_to_vmem [thread:$0]  %s249, 128, %s251, %s236
        $region36: #{tpu_custom_call.1} parent=31 // pred_fallthru
          _
        // Predicated region
        $region37: #{tpu_custom_call.1} parent=31 // pred_check
          %p254 = pneg %p83
        $region38: #{tpu_custom_call.1} parent=31 // pred_check_branch
          %256 = sbr.rel (%p254) target = $region40
        $region39: #{tpu_custom_call.1} parent=31 // pred_region
          %s257 = sand.u32 %s73, 1
          %s258 = scalar_lea.sflag [#allocation6], %s257
          %s259 = sand.u32 %s73, 1
          %s260 = smul.addr %s259, 8
          %s261 = scalar_lea.vmem [#allocation5], %s260
          %s262 = smul.u32 2, %s29
          %264 = vsyncadd %s258, 0
          %s265 = smul.addr %s28, 2
          %s266 = sadd.s32 %s262, %s265
          %s267 = smul.addr %s266, 4
          %s268 = scalar_lea.hbm %s1, %s267
          %s270 = sshll.u32 %s268, 4
          %s271 = int_to_ptr.hbm [resolvable:$true] %s270
          %s272 = sshll.u32 %s261, 4
          %s273 = int_to_ptr.vmem [resolvable:$true] %s272
          %275 = dma.hbm_to_vmem [thread:$0]  %s271, 128, %s273, %s258
        $region40: #{tpu_custom_call.1} parent=31 // pred_fallthru
          _
      $region32: #{tpu_custom_call.1} parent=5 // pred_fallthru
        _
      %p276 = scmp.le.s32.totalorder 1, %s21
      %p277 = scmp.lt.s32.totalorder %s21, 3
      %p278 = pnand %p276, %p277
      %p279 = pneg %p278
      // Predicated region
      $region41: #{tpu_custom_call.1} parent=5 // pred_check
        _
      $region42: #{tpu_custom_call.1} parent=5 // pred_check_branch
        %281 = sbr.rel (%p278) target = $region44
      $region43: #{tpu_custom_call.1} parent=5 // pred_region
        %s282 = ssub.s32 %s21, 1
        %s283 = sand.u32 %s48, 1
        %s284 = scalar_lea.sflag [#allocation3], %s283
        %s285 = sand.u32 %s48, 1
        %s286 = smul.addr %s285, 8
        %s287 = scalar_lea.vmem [#allocation2], %s286
        // Predicated region
        $region45: #{tpu_custom_call.1} parent=43 // pred_check
          %p288 = pneg %p61
        $region46: #{tpu_custom_call.1} parent=43 // pred_check_branch
          %290 = sbr.rel (%p288) target = $region48
        $region47: #{tpu_custom_call.1} parent=43 // pred_region
          %292 = dma.done %s284, 128
        $region48: #{tpu_custom_call.1} parent=43 // pred_fallthru
          _
        %s293 = sand.u32 %s76, 1
        %s294 = scalar_lea.sflag [#allocation6], %s293
        %s295 = sand.u32 %s76, 1
        %s296 = smul.addr %s295, 8
        %s297 = scalar_lea.vmem [#allocation5], %s296
        // Predicated region
        $region49: #{tpu_custom_call.1} parent=43 // pred_check
          %p298 = pneg %p89
        $region50: #{tpu_custom_call.1} parent=43 // pred_check_branch
          %300 = sbr.rel (%p298) target = $region52
        $region51: #{tpu_custom_call.1} parent=43 // pred_region
          %302 = dma.done %s294, 128
        $region52: #{tpu_custom_call.1} parent=43 // pred_fallthru
          _
        %s303 = sand.u32 %s48, 1
        %s304 = scalar_lea.sflag [#allocation3], %s303
        %s305 = sand.u32 %s48, 1
        %s306 = smul.addr %s305, 8
        %s307 = scalar_lea.vmem [#allocation2], %s306
        %p308 = pneg %p61
        %p309 = pneg %p58
        %s310 = sand.u32 %s76, 1
        %s311 = scalar_lea.sflag [#allocation6], %s310
        %s312 = sand.u32 %s76, 1
        %s313 = smul.addr %s312, 8
        %s314 = scalar_lea.vmem [#allocation5], %s313
        %p315 = pneg %p89
        %p316 = pneg %p86
        %p317 = pneg %p110
        %p318 = pneg %p107
        %p319 = pneg %p131
        %p320 = pneg %p128
        %p321 = pneg %p152
        %p322 = pneg %p149
        %p323 = pneg %p173
        %p324 = pneg %p170
        %p325 = pneg %p201
        %p326 = pneg %p198
        %s327 = sand.u32 %s188, 1
        %s328 = scalar_lea.sflag [#allocation4], %s327
        %s329 = sand.u32 %s188, 1
        %s330 = smul.addr %s329, 4
        %s331 = scalar_lea.vmem [#allocation7], %s330
        %s332 = smul.u32 2, %s31
        %s333 = smul.u32 2, %s31
        %v334 = vld [vmem:[%s287] sm:$0xff]
        %v335 = vld [vmem:[%s2] sm:$0xff]
        %337 = vst [vmem:[#allocation1] ss:$2 sm:$0xff] %v334
        %v338 = vld.sshfl [vmem:[#allocation1] sm:$0xff pattern:$0x75316420]
        %v339 = vld.sshfl [vmem:[#allocation1 + $0x8] sm:$0xff pattern:$0x75316420]
        %vm340 = vcmask 31744
        %v342 = vsel %vm340, %v335, 0
        %vm344 = vcmask 1043456
        %v345 = vsel %vm344, %v338, 0
        %v347 = vsel %vm344, %v339, 0
        %349 = vmatpush.msra.mxu0 0.0
        %350 = vmatpush.msra.mxu0 0.0
        %351 = vmatpush.msra.mxu0 0.0
        %352 = vmatpush.msra.mxu0 0.0
        %353 = vmatpush.msra.mxu0 0.0
        %354 = vmatpush.msra.mxu0 0.0
        %355 = vmatpush.msra.mxu0 0.0
        %356 = vmatpush.msra.mxu0 0.0
        %357 = vmatpush.msra.mxu0 0.0
        %358 = vmatpush.msra.mxu0 0.0
        %359 = vmatpush.msra.mxu0 0.0
        %360 = vmatpush.msra.mxu0 0.0
        %361 = vmatpush.msra.mxu0 0.0
        %362 = vmatpush.msra.mxu0 0.0
        %363 = vmatpush.msra.mxu0 0.0
        %364 = vmatpush.msra.mxu0 %v345
        %365 = vmatmul.f32.gmra.mxu0 %v342
        %v366 = vpop.f32.mrf.mxu0
        %v367 = vadd.f32 0.0, %v366
        %368 = vdwg.mxu0
        %369 = vmatpush.msra.mxu0 0.0
        %370 = vmatpush.msra.mxu0 0.0
        %371 = vmatpush.msra.mxu0 0.0
        %372 = vmatpush.msra.mxu0 0.0
        %373 = vmatpush.msra.mxu0 0.0
        %374 = vmatpush.msra.mxu0 0.0
        %375 = vmatpush.msra.mxu0 0.0
        %376 = vmatpush.msra.mxu0 0.0
        %377 = vmatpush.msra.mxu0 0.0
        %378 = vmatpush.msra.mxu0 0.0
        %379 = vmatpush.msra.mxu0 0.0
        %380 = vmatpush.msra.mxu0 0.0
        %381 = vmatpush.msra.mxu0 0.0
        %382 = vmatpush.msra.mxu0 0.0
        %383 = vmatpush.msra.mxu0 0.0
        %384 = vmatpush.msra.mxu0 %v347
        %385 = vmatmul.f32.gmra.mxu0 %v342
        %v386 = vpop.f32.mrf.mxu0
        %v387 = vadd.f32 0.0, %v386
        %388 = vdwg.mxu0
        %v389 = vmax.f32 %v367, 0.0
        %v390 = vmax.f32 %v387, 0.0
        %v391 = vld [vmem:[%s3] sm:$0xff]
        %vm392 = vcmask 64512
        %v394 = vsel %vm392, %v391, 0
        %396 = vmatpush.msra.mxu0 0.0
        %397 = vmatpush.msra.mxu0 0.0
        %398 = vmatpush.msra.mxu0 0.0
        %399 = vmatpush.msra.mxu0 0.0
        %400 = vmatpush.msra.mxu0 0.0
        %401 = vmatpush.msra.mxu0 0.0
        %402 = vmatpush.msra.mxu0 0.0
        %403 = vmatpush.msra.mxu0 0.0
        %404 = vmatpush.msra.mxu0 0.0
        %405 = vmatpush.msra.mxu0 0.0
        %406 = vmatpush.msra.mxu0 0.0
        %407 = vmatpush.msra.mxu0 0.0
        %408 = vmatpush.msra.mxu0 0.0
        %409 = vmatpush.msra.mxu0 0.0
        %410 = vmatpush.msra.mxu0 0.0
        %411 = vmatpush.msra.mxu0 %v389
        %412 = vmatmul.f32.gmra.mxu0 %v394
        %v413 = vpop.f32.mrf.mxu0
        %v414 = vadd.f32 0.0, %v413
        %415 = vdwg.mxu0
        %416 = vmatpush.msra.mxu0 0.0
        %417 = vmatpush.msra.mxu0 0.0
        %418 = vmatpush.msra.mxu0 0.0
        %419 = vmatpush.msra.mxu0 0.0
        %420 = vmatpush.msra.mxu0 0.0
        %421 = vmatpush.msra.mxu0 0.0
        %422 = vmatpush.msra.mxu0 0.0
        %423 = vmatpush.msra.mxu0 0.0
        %424 = vmatpush.msra.mxu0 0.0
        %425 = vmatpush.msra.mxu0 0.0
        %426 = vmatpush.msra.mxu0 0.0
        %427 = vmatpush.msra.mxu0 0.0
        %428 = vmatpush.msra.mxu0 0.0
        %429 = vmatpush.msra.mxu0 0.0
        %430 = vmatpush.msra.mxu0 0.0
        %431 = vmatpush.msra.mxu0 %v390
        %432 = vmatmul.f32.gmra.mxu0 %v394
        %v433 = vpop.f32.mrf.mxu0
        %v434 = vadd.f32 0.0, %v433
        %435 = vdwg.mxu0
        %v436 = vmax.f32 %v414, 0.0
        %v437 = vmax.f32 %v434, 0.0
        %v438 = vld [vmem:[%s4] sm:$0xf]
        %v440 = vsel %vm392, %v438, 0
        %442 = vmatpush.msra.mxu0 0.0
        %443 = vmatpush.msra.mxu0 0.0
        %444 = vmatpush.msra.mxu0 0.0
        %445 = vmatpush.msra.mxu0 0.0
        %446 = vmatpush.msra.mxu0 0.0
        %447 = vmatpush.msra.mxu0 0.0
        %448 = vmatpush.msra.mxu0 0.0
        %449 = vmatpush.msra.mxu0 0.0
        %450 = vmatpush.msra.mxu0 0.0
        %451 = vmatpush.msra.mxu0 0.0
        %452 = vmatpush.msra.mxu0 0.0
        %453 = vmatpush.msra.mxu0 0.0
        %454 = vmatpush.msra.mxu0 0.0
        %455 = vmatpush.msra.mxu0 0.0
        %456 = vmatpush.msra.mxu0 0.0
        %457 = vmatpush.msra.mxu0 %v436
        %458 = vmatmul.f32.gmra.mxu0 %v440
        %v459 = vpop.f32.mrf.mxu0
        %v460 = vadd.f32 0.0, %v459
        %461 = vdwg.mxu0
        %462 = vmatpush.msra.mxu0 0.0
        %463 = vmatpush.msra.mxu0 0.0
        %464 = vmatpush.msra.mxu0 0.0
        %465 = vmatpush.msra.mxu0 0.0
        %466 = vmatpush.msra.mxu0 0.0
        %467 = vmatpush.msra.mxu0 0.0
        %468 = vmatpush.msra.mxu0 0.0
        %469 = vmatpush.msra.mxu0 0.0
        %470 = vmatpush.msra.mxu0 0.0
        %471 = vmatpush.msra.mxu0 0.0
        %472 = vmatpush.msra.mxu0 0.0
        %473 = vmatpush.msra.mxu0 0.0
        %474 = vmatpush.msra.mxu0 0.0
        %475 = vmatpush.msra.mxu0 0.0
        %476 = vmatpush.msra.mxu0 0.0
        %477 = vmatpush.msra.mxu0 %v437
        %478 = vmatmul.f32.gmra.mxu0 %v440
        %v479 = vpop.f32.mrf.mxu0
        %v480 = vadd.f32 0.0, %v479
        %481 = vdwg.mxu0
        %v482 = vld [vmem:[%s297] sm:$0xff]
        %484 = vst [vmem:[#allocation1] ss:$2 sm:$0xff] %v482
        %v485 = vld.sshfl [vmem:[#allocation1] sm:$0xff pattern:$0x75316420]
        %v486 = vld.sshfl [vmem:[#allocation1 + $0x8] sm:$0xff pattern:$0x75316420]
        %v489 = vsub.f32 %v460, %v485
        %v490 = vsub.f32 %v480, %v486
        %v491 = vmul.f32 %v489, %v489
        %v492 = vmul.f32 %v490, %v490
        %v493 = vld [vmem:[%s5] sm:$0xf]
        %495 = vset.pattern.permute.xlu0 0
        %496 = vperm.xlu0 %495, %v493
        %v497 = vpop.permute.xlu0 %496
        %v499 = vmul.f32 %v491, %v497
        %v500 = vmul.f32 %v492, %v497
        %v501 = vadd.f32 %v499, %v500
        %502 = vst [vmem:[%s331] sm:$0xf] %v501
        %s503 = sand.u32 %s188, 1
        %s504 = scalar_lea.sflag [#allocation4], %s503
        %s505 = sand.u32 %s188, 1
        %s506 = smul.addr %s505, 4
        %s507 = scalar_lea.vmem [#allocation7], %s506
        // Predicated region
        $region53: #{tpu_custom_call.1} parent=43 // pred_check
          %p508 = pneg %p198
        $region54: #{tpu_custom_call.1} parent=43 // pred_check_branch
          %510 = sbr.rel (%p508) target = $region56
        $region55: #{tpu_custom_call.1} parent=43 // pred_region
          %512 = vsyncadd %s504, 0
          %s513 = sadd.s32 %s31, %s30
          %s514 = smul.addr %s513, 4
          %s515 = scalar_lea.hbm %s6, %s514
          %s517 = sshll.u32 %s507, 4
          %s518 = int_to_ptr.vmem [resolvable:$true] %s517
          %s519 = sshll.u32 %s515, 4
          %s520 = int_to_ptr.hbm [resolvable:$true] %s519
          %522 = dma.vmem_to_hbm [thread:$0]  %s518, 64, %s520, %s504
        $region56: #{tpu_custom_call.1} parent=43 // pred_fallthru
          _
      $region44: #{tpu_custom_call.1} parent=5 // pred_fallthru
        _
      %p523 = scmp.le.s32.totalorder 2, %s21
      // Predicated region
      $region57: #{tpu_custom_call.1} parent=5 // pred_check
        %p524 = pneg %p523
      $region58: #{tpu_custom_call.1} parent=5 // pred_check_branch
        %526 = sbr.rel (%p524) target = $region60
      $region59: #{tpu_custom_call.1} parent=5 // pred_region
        %s527 = ssub.s32 %s21, 2
        // Predicated region
        $region61: #{tpu_custom_call.1} parent=59 // pred_check
          %p528 = pneg %p204
        $region62: #{tpu_custom_call.1} parent=59 // pred_check_branch
          %530 = sbr.rel (%p528) target = $region64
        $region63: #{tpu_custom_call.1} parent=59 // pred_region
          %s531 = sand.u32 %s189, 1
          %s532 = scalar_lea.sflag [#allocation4], %s531
          %s533 = sand.u32 %s189, 1
          %s534 = smul.addr %s533, 4
          %s535 = scalar_lea.vmem [#allocation7], %s534
          %537 = dma.done %s532, 64
        $region64: #{tpu_custom_call.1} parent=59 // pred_fallthru
          _
      $region60: #{tpu_custom_call.1} parent=5 // pred_fallthru
        _
    $region6: #{tpu_custom_call.1} parent=1 // loop_footer
      %s25 = sadd.s32 1, %s21
    $region7: #{tpu_custom_call.1} parent=1 // loop_footer_branch
      %20 = sbr.rel target = $region3
    $region8: #{tpu_custom_call.1} parent=1 // loop_exit
      _
    %538 = vsyncpa [#allocation3], 1
    %s539 = scalar_lea.sflag [#allocation3], 1
    %540 = vsyncpa %s539, 1
    %541 = vsyncpa [#allocation6], 1
    %s542 = scalar_lea.sflag [#allocation6], 1
    %543 = vsyncpa %s542, 1
    %544 = vsyncpa [#allocation4], 1
    %s545 = scalar_lea.sflag [#allocation4], 1
    %546 = vsyncpa %s545, 1

</llo_original>
